<compile_context>
chip_gen: v7x
topology: tpu7x:2x2x1
jax: 0.10.0
libtpu: 0.0.40
codegen_flags: <defaults>
</compile_context>

<pallas_src>
import math

import jax
import jax.numpy as jnp
from jax.experimental import pallas as pl
from jax.experimental.pallas import tpu as pltpu

LANE = 128      # vreg lane width (last dim)
SUBLANE = 8     # vreg sublane count (second-to-last dim)


def _round_up(x, m):
    return (x + m - 1) // m * m


# ---------------------------------------------------------------------------
# Path 1: batched small graphs (GraphDTA molecule graphs), fully resident per
# graph, weight/bias resident across the whole batch.
# ---------------------------------------------------------------------------
def _gcn_batched_kernel(x_ref, adj_ref, w_ref, b_ref, o_ref):
    # x_ref:   (N_pad, Fin_pad)   f32   (per-graph block, batch dim squeezed)
    # adj_ref: (N_pad, N_pad)     bf16  ({0,1} -> exact)
    # w_ref:   (Fin_pad, Fout_pad) f32  (resident: constant index_map)
    # b_ref:   (1, Fout_pad)       f32  (resident: constant index_map)
    support = jnp.dot(x_ref[...], w_ref[...], preferred_element_type=jnp.float32)
    adj = adj_ref[...].astype(jnp.float32)          # exact: values are {0,1}
    out = jnp.dot(adj, support, preferred_element_type=jnp.float32)
    o_ref[...] = (out + b_ref[...]).astype(o_ref.dtype)


def graph_convolution(x, adj, weight, bias=None):
    """GraphConvolution forward: adj @ (x @ weight) + bias.

    x:   [N, F_in]  or [B, N, F_in]
    adj: [N, N]     or [B, N, N]   (dense {0,1} stand-in for the sparse adj)
    weight: [F_in, F_out];  bias: [F_out] or None
    """
    squeeze_batch = (x.ndim == 2)
    if squeeze_batch:
        x = x[None]
        adj = adj[None]
    B, N, f_in = x.shape
    f_out = weight.shape[1]
    if bias is None:
        bias = jnp.zeros((f_out,), dtype=weight.dtype)

    # Lane/sublane padding: F_out (output lane dim) and F_in padded to 128 so
    # stores / x loads are unmasked; N padded to a sublane multiple.
    n_pad = _round_up(N, SUBLANE)
    fi_pad = _round_up(f_in, LANE)
    fo_pad = _round_up(f_out, LANE)

    x_p = jnp.zeros((B, n_pad, fi_pad), jnp.float32).at[:, :N, :f_in].set(
        x.astype(jnp.float32))
    # adj values are {0,1}: bf16 cast is exact and halves adj HBM traffic.
    adj_p = jnp.zeros((B, n_pad, n_pad), jnp.bfloat16).at[:, :N, :N].set(
        adj.astype(jnp.bfloat16))
    w_p = jnp.zeros((fi_pad, fo_pad), jnp.float32).at[:f_in, :f_out].set(
        weight.astype(jnp.float32))
    b_p = jnp.zeros((1, fo_pad), jnp.float32).at[0, :f_out].set(
        bias.astype(jnp.float32))

    flops = 2 * B * n_pad * fi_pad * fo_pad + 2 * B * n_pad * n_pad * fo_pad
    bytes_accessed = (x_p.size * 4 + adj_p.size * 2 + w_p.size * 4
                      + b_p.size * 4 + B * n_pad * fo_pad * 4)

    out = pl.pallas_call(
        _gcn_batched_kernel,
        out_shape=jax.ShapeDtypeStruct((B, n_pad, fo_pad), jnp.float32),
        grid=(B,),
        in_specs=[
            pl.BlockSpec((None, n_pad, fi_pad), lambda b: (b, 0, 0)),  # x per graph
            pl.BlockSpec((None, n_pad, n_pad), lambda b: (b, 0, 0)),   # adj per graph
            pl.BlockSpec((fi_pad, fo_pad), lambda b: (0, 0)),          # weight resident
            pl.BlockSpec((1, fo_pad), lambda b: (0, 0)),               # bias resident
        ],
        out_specs=pl.BlockSpec((None, n_pad, fo_pad), lambda b: (b, 0, 0)),
        compiler_params=pltpu.CompilerParams(
            # Independent graphs: shard across both TensorCores on v7x.
            dimension_semantics=("parallel",),
        ),
        cost_estimate=pl.CostEstimate(
            flops=flops, transcendentals=0, bytes_accessed=bytes_accessed),
    )(x_p, adj_p, w_p, b_p)

    out = out[:, :N, :f_out]
    if squeeze_batch:
        out = out[0]
    return out


# ---------------------------------------------------------------------------
# Path 2: single large graph, row/contraction-tiled adj @ support with an f32
# VMEM accumulator.  support = x @ W is hoisted (computed once, row-tiled).
# ---------------------------------------------------------------------------
def _support_kernel(x_ref, w_ref, o_ref):
    o_ref[...] = jnp.dot(x_ref[...], w_ref[...],
                         preferred_element_type=jnp.float32).astype(o_ref.dtype)


def _adj_matmul_kernel(adj_ref, s_ref, b_ref, o_ref, acc_ref):
    k = pl.program_id(1)

    @pl.when(k == 0)
    def _():
        acc_ref[...] = jnp.zeros_like(acc_ref)

    acc_ref[...] += jnp.dot(adj_ref[...].astype(jnp.float32), s_ref[...],
                            preferred_element_type=jnp.float32)

    @pl.when(k == pl.num_programs(1) - 1)
    def _():
        o_ref[...] = (acc_ref[...] + b_ref[...]).astype(o_ref.dtype)


def graph_convolution_tiled(x, adj, weight, bias=None, *, tm=128, tk=128):
    """Tiled GCN forward for a single large graph (N in the thousands).

    Keep 2 * tm * tk * 2B (double-buffered bf16 adj tiles) + N * F_out_pad * 4B
    (resident support) comfortably under the scoped-VMEM budget (v7x: 64 MiB
    physical).  Defaults (128, 128) are safe on all generations.
    """
    N, f_in = x.shape
    f_out = weight.shape[1]
    if bias is None:
        bias = jnp.zeros((f_out,), dtype=weight.dtype)

    fi_pad = _round_up(f_in, LANE)
    fo_pad = _round_up(f_out, LANE)
    n_pad = _round_up(N, math.lcm(tm, tk))

    x_p = jnp.zeros((n_pad, fi_pad), jnp.float32).at[:N, :f_in].set(
        x.astype(jnp.float32))
    adj_p = jnp.zeros((n_pad, n_pad), jnp.bfloat16).at[:N, :N].set(
        adj.astype(jnp.bfloat16))
    w_p = jnp.zeros((fi_pad, fo_pad), jnp.float32).at[:f_in, :f_out].set(
        weight.astype(jnp.float32))
    b_p = jnp.zeros((1, fo_pad), jnp.float32).at[0, :f_out].set(
        bias.astype(jnp.float32))

    # Stage 1: support = x @ W (computed once; weight resident across row tiles).
    support = pl.pallas_call(
        _support_kernel,
        out_shape=jax.ShapeDtypeStruct((n_pad, fo_pad), jnp.float32),
        grid=(n_pad // tm,),
        in_specs=[
            pl.BlockSpec((tm, fi_pad), lambda i: (i, 0)),
            pl.BlockSpec((fi_pad, fo_pad), lambda i: (0, 0)),
        ],
        out_specs=pl.BlockSpec((tm, fo_pad), lambda i: (i, 0)),
        compiler_params=pltpu.CompilerParams(dimension_semantics=("parallel",)),
        cost_estimate=pl.CostEstimate(
            flops=2 * n_pad * fi_pad * fo_pad, transcendentals=0,
            bytes_accessed=x_p.size * 4 + w_p.size * 4 + n_pad * fo_pad * 4),
    )(x_p, w_p)

    # Stage 2: out = adj @ support + bias, tiled (row tiles x contraction tiles).
    out = pl.pallas_call(
        _adj_matmul_kernel,
        out_shape=jax.ShapeDtypeStruct((n_pad, fo_pad), jnp.float32),
        grid=(n_pad // tm, n_pad // tk),
        in_specs=[
            pl.BlockSpec((tm, tk), lambda i, k: (i, k)),       # adj tile (bf16)
            pl.BlockSpec((tk, fo_pad), lambda i, k: (k, 0)),   # support rows
            pl.BlockSpec((1, fo_pad), lambda i, k: (0, 0)),    # bias resident
        ],
        out_specs=pl.BlockSpec((tm, fo_pad), lambda i, k: (i, 0)),
        scratch_shapes=[pltpu.VMEM((tm, fo_pad), jnp.float32)],
        compiler_params=pltpu.CompilerParams(
            dimension_semantics=("parallel", "arbitrary")),
        cost_estimate=pl.CostEstimate(
            flops=2 * n_pad * n_pad * fo_pad, transcendentals=0,
            bytes_accessed=adj_p.size * 2 + support.size * 4
                           + b_p.size * 4 + n_pad * fo_pad * 4),
    )(adj_p, support, b_p)

    return out[:N, :f_out]


def init_params(key, in_feature, out_feature):
    # Xavier normal init for weight (matches nn.init.xavier_normal_), bias = 0.
    std = math.sqrt(2.0 / (in_feature + out_feature))
    weight = std * jax.random.normal(key, (in_feature, out_feature), dtype=jnp.float32)
    bias = jnp.zeros((out_feature,), dtype=jnp.float32)
    return weight, bias


if __name__ == "__main__":
    key = jax.random.PRNGKey(0)
    k_x, k_adj, k_w, k_x2, k_adj2, k_w2 = jax.random.split(key, 6)

    # ---- Batched small-graph path (GraphDTA-like molecule graphs) ----------
    B, N, in_feature, out_feature = 4, 16, 32, 8

    x = jax.random.normal(k_x, (B, N, in_feature), dtype=jnp.float32)
    a = (jax.random.uniform(k_adj, (B, N, N)) > 0.7).astype(jnp.float32)
    eye = jnp.eye(N, dtype=jnp.float32)[None]
    adj = jnp.clip(a + jnp.swapaxes(a, -1, -2) + eye, 0.0, 1.0)

    weight, bias = init_params(k_w, in_feature, out_feature)

    out = graph_convolution(x, adj, weight, bias)
    jax.block_until_ready(out)

    ref = jnp.einsum("bij,bjf->bif", adj,
                     jnp.einsum("bni,if->bnf", x, weight)) + bias
    assert out.shape == (B, N, out_feature)
    assert jnp.allclose(out, ref, atol=1e-4, rtol=1e-4)

    # Single-graph call still supported (module-equivalent signature).
    out0 = graph_convolution(x[0], adj[0], weight, bias)
    jax.block_until_ready(out0)
    assert jnp.allclose(out0, ref[0], atol=1e-4, rtol=1e-4)

    # ---- Tiled large-graph path (validated at a modest size) ---------------
    N2, f_in2, f_out2 = 256, 64, 32
    x2 = jax.random.normal(k_x2, (N2, f_in2), dtype=jnp.float32)
    a2 = (jax.random.uniform(k_adj2, (N2, N2)) > 0.9).astype(jnp.float32)
    adj2 = jnp.clip(a2 + a2.T + jnp.eye(N2, dtype=jnp.float32), 0.0, 1.0)
    w2, b2 = init_params(k_w2, f_in2, f_out2)

    out2 = graph_convolution_tiled(x2, adj2, w2, b2, tm=128, tk=128)
    jax.block_until_ready(out2)
    ref2 = adj2 @ (x2 @ w2) + b2
    assert out2.shape == (N2, f_out2)
    assert jnp.allclose(out2, ref2, atol=1e-3, rtol=1e-3)

    print("KERNEL_OK")
</pallas_src>

<mosaic_0001>
module attributes {stable_mosaic.version = 11 : i64} {
  func.func @_gcn_batched_kernel(%arg0: i32, %arg1: memref<1x16x128xf32, #tpu.memory_space<vmem>>, %arg2: memref<1x16x16xbf16, #tpu.memory_space<vmem>>, %arg3: memref<128x128xf32, #tpu.memory_space<vmem>>, %arg4: memref<1x128xf32, #tpu.memory_space<vmem>>, %arg5: memref<1x16x128xf32, #tpu.memory_space<vmem>>) attributes {dimension_semantics = [#tpu.dimension_semantics<parallel>], iteration_bounds = array<i64: 4>, scalar_prefetch = 0 : i64, scratch_operands = 0 : i64, tpu.core_type = #tpu.core_type<tc>, window_params = [{transform_indices = @transform_0, window_bounds = array<i64: 1, 16, 128>}, {transform_indices = @transform_1, window_bounds = array<i64: 1, 16, 16>}, {pipeline_mode = #tpu.pipeline_mode<synchronous>, transform_indices = @transform_2, window_bounds = array<i64: 128, 128>}, {pipeline_mode = #tpu.pipeline_mode<synchronous>, transform_indices = @transform_3, window_bounds = array<i64: 1, 128>}, {transform_indices = @transform_4, window_bounds = array<i64: 1, 16, 128>}]} {
    %c0 = arith.constant 0 : index
    %c0_0 = arith.constant 0 : index
    %c0_1 = arith.constant 0 : index
    %0 = vector.load %arg1[%c0, %c0_0, %c0_1] : memref<1x16x128xf32, #tpu.memory_space<vmem>>, vector<1x16x128xf32>
    %1 = vector.shape_cast %0 : vector<1x16x128xf32> to vector<16x128xf32>
    %c0_2 = arith.constant 0 : index
    %c0_3 = arith.constant 0 : index
    %2 = vector.load %arg3[%c0_2, %c0_3] : memref<128x128xf32, #tpu.memory_space<vmem>>, vector<128x128xf32>
    %cst = arith.constant dense<0.000000e+00> : vector<16x128xf32>
    %3 = tpu.matmul %1, %2, %cst {dimension_numbers = #tpu.dot_dimension_numbers<[1], [0], [0], [1], [0, 0, 1, 1], [], []>} : vector<16x128xf32>, vector<128x128xf32>, vector<16x128xf32> -> vector<16x128xf32>
    %c0_4 = arith.constant 0 : index
    %c0_5 = arith.constant 0 : index
    %c0_6 = arith.constant 0 : index
    %4 = vector.load %arg2[%c0_4, %c0_5, %c0_6] : memref<1x16x16xbf16, #tpu.memory_space<vmem>>, vector<1x16x16xbf16>
    %5 = vector.shape_cast %4 : vector<1x16x16xbf16> to vector<16x16xbf16>
    %6 = arith.extf %5 : vector<16x16xbf16> to vector<16x16xf32>
    %cst_7 = arith.constant dense<0.000000e+00> : vector<16x128xf32>
    %7 = tpu.matmul %6, %3, %cst_7 {dimension_numbers = #tpu.dot_dimension_numbers<[1], [0], [0], [1], [0, 0, 1, 1], [], []>} : vector<16x16xf32>, vector<16x128xf32>, vector<16x128xf32> -> vector<16x128xf32>
    %c0_8 = arith.constant 0 : index
    %c0_9 = arith.constant 0 : index
    %8 = vector.load %arg4[%c0_8, %c0_9] : memref<1x128xf32, #tpu.memory_space<vmem>>, vector<1x128xf32>
    %9 = vector.broadcast %8 : vector<1x128xf32> to vector<16x128xf32>
    %10 = arith.addf %7, %9 : vector<16x128xf32>
    %c0_10 = arith.constant 0 : index
    %c0_11 = arith.constant 0 : index
    %c0_12 = arith.constant 0 : index
    %11 = vector.load %arg5[%c0_10, %c0_11, %c0_12] : memref<1x16x128xf32, #tpu.memory_space<vmem>>, vector<1x16x128xf32>
    %12 = vector.shape_cast %11 : vector<1x16x128xf32> to vector<16x128xf32>
    %13 = vector.shape_cast %10 : vector<16x128xf32> to vector<1x16x128xf32>
    tpu.vector_store %arg5[%c0_10, %c0_11, %c0_12], %13 {strides = array<i32>} : memref<1x16x128xf32, #tpu.memory_space<vmem>>, vector<1x16x128xf32>,
    return
  }
  func.func @transform_0(%arg0: i32) -> (i32, i32, i32) {
    %c0_i32 = arith.constant 0 : i32
    %c0_i32_0 = arith.constant 0 : i32
    %c0_i32_1 = arith.constant 0 : i32
    return %arg0, %c0_i32, %c0_i32_0 : i32, i32, i32
  }
  func.func @transform_1(%arg0: i32) -> (i32, i32, i32) {
    %c0_i32 = arith.constant 0 : i32
    %c0_i32_0 = arith.constant 0 : i32
    %c0_i32_1 = arith.constant 0 : i32
    return %arg0, %c0_i32, %c0_i32_0 : i32, i32, i32
  }
  func.func @transform_2(%arg0: i32) -> (i32, i32) {
    %c0_i32 = arith.constant 0 : i32
    %c0_i32_0 = arith.constant 0 : i32
    %c0_i32_1 = arith.constant 0 : i32
    return %c0_i32, %c0_i32_0 : i32, i32
  }
  func.func @transform_3(%arg0: i32) -> (i32, i32) {
    %c0_i32 = arith.constant 0 : i32
    %c0_i32_0 = arith.constant 0 : i32
    %c0_i32_1 = arith.constant 0 : i32
    return %c0_i32, %c0_i32_0 : i32, i32
  }
  func.func @transform_4(%arg0: i32) -> (i32, i32, i32) {
    %c0_i32 = arith.constant 0 : i32
    %c0_i32_0 = arith.constant 0 : i32
    %c0_i32_1 = arith.constant 0 : i32
    return %arg0, %c0_i32, %c0_i32_0 : i32, i32, i32
  }
}

</mosaic_0001>

<llo_original>
// kernel: tpu_custom_call.1
$region0: #{tpu_custom_call.1}
  #allocation0 [shape = 'u32[]', space=smem, size = 0x4, offset = 0x4, fixed_abs, tag = 'smem constant byte address 0x4 - core index']
  #allocation1 [shape = 'u32[144,128]{1,0:T(1,128)}', space=vmem, size = 0x12000, scoped, tag = 'internal scratch']
  %s0 = inlined_call_operand.hbm [shape: f32[4,16,128], index: 0, kind: input, shape index: {}]
  %s1 = inlined_call_operand.hbm [shape: bf16[4,16,16], index: 1, kind: input, shape index: {}]
  %s2 = inlined_call_operand.hbm [shape: f32[128,128], index: 2, kind: input, shape index: {}]
  %s3 = inlined_call_operand.vmem [shape: f32[1,128], index: 3, kind: input, shape index: {}]
  %s4 = inlined_call_operand.hbm [shape: f32[4,16,128], index: 4, kind: output, shape index: {}]
  %s5 = sld [smem:[#allocation0]]
  $region61: #{tpu_custom_call.1} parent=0
    _
  %s7 = ssub.s32 1, %s5
  %s8 = scalar_select 0, %s7, %s5
  $region1: #{tpu_custom_call.1} parent=0
    #allocation2 [shape = 'u8[16384]{0}', space=vmem, size = 0x4000, scoped, tag = 'input window, operand 0']
    #allocation3 [shape = 's32[2]{0}', space=sflag, size = 0x8, scoped, tag = 'scoped memory for tpu_custom_call.1']
    #allocation4 [shape = 's32[2]{0}', space=sflag, size = 0x8, scoped, tag = 'scoped memory for tpu_custom_call.1']
    #allocation5 [shape = 'u8[8192]{0}', space=vmem, size = 0x2000, scoped, tag = 'input window, operand 1']
    #allocation6 [shape = 's32[2]{0}', space=sflag, size = 0x8, scoped, tag = 'scoped memory for tpu_custom_call.1']
    #allocation7 [shape = 'u8[65536]{0}', space=vmem, size = 0x10000, scoped, tag = 'input window, operand 2, single buffered']
    #allocation8 [shape = 'u8[16384]{0}', space=vmem, size = 0x4000, scoped, tag = 'output window, operand 0']
    %9 = vsyncpa [#allocation3], 0
    %s10 = scalar_lea.sflag [#allocation3], 1
    %11 = vsyncpa %s10, 0
    %12 = vsyncpa [#allocation6], 0
    %s13 = scalar_lea.sflag [#allocation6], 1
    %14 = vsyncpa %s13, 0
    %15 = vsyncpa [#allocation4], 0
    %s16 = scalar_lea.sflag [#allocation4], 1
    %17 = vsyncpa %s16, 0
    loop: start=0, step=1, limit=6
    $region2: #{tpu_custom_call.1} parent=1 // loop_pre_header
      _
    $region3: #{tpu_custom_call.1} parent=1 // loop_header
      %s19 = sphi 0, %s23
      %p20 = scmp.ge.s32.totalorder %s19, 6
      %s29 = sphi 0, %s31
      %s32 = sphi 0, %s29
      %s33 = sphi 0, %s32
      %s49 = sphi 0, %s33
      %s55 = sphi 0, %s57
      %s58 = sphi 0, %s55
      %s59 = sphi 0, %s58
      %s75 = sphi 0, %s59
      %s79 = sphi 0, %s79
      %s81 = sphi 0, %s79
      %s82 = sphi 0, %s81
      %s96 = sphi 0, %s82
      %s100 = sphi 0, %s100
      %s102 = sphi 0, %s100
      %s103 = sphi 0, %s102
      %s117 = sphi 0, %s103
      %s123 = sphi 0, %s125
      %s126 = sphi 0, %s123
      %s127 = sphi 0, %s126
      %s143 = sphi 0, %s127
    $region4: #{tpu_custom_call.1} parent=1 // loop_header_branch
      %22 = sbr.rel (%p20) target = $region8
    $region5: #{tpu_custom_call.1} parent=1 // loop_body
      %s24 = ssub.s32 %s19, 1
      %s25 = ssub.s32 %s19, 2
      %s26 = sadd.s32 %s19, 1
      %s27 = ssub.s32 %s19, %s26
      %p28 = scmp.eq.s32.totalorder %s27, 0
      %s30 = sadd.s32 %s29, 1
      %s31 = scalar_select %p28, %s29, %s30
      %p34 = pneg %p28
      %p35 = scmp.eq.s32.totalorder %s19, 3
      %p36 = por %p34, %p35
      %p37 = scmp.ne.s32.totalorder %s29, %s32
      %p38 = scmp.eq.s32.totalorder %s19, 0
      %p39 = por %p37, %p38
      %p40 = scmp.ne.s32.totalorder %s29, %s32
      %p41 = scmp.eq.s32.totalorder %s24, 3
      %p42 = por %p40, %p41
      %p43 = scmp.ne.s32.totalorder %s32, %s33
      %p44 = scmp.eq.s32.totalorder %s24, 0
      %p45 = por %p43, %p44
      %p46 = scmp.ne.s32.totalorder %s32, %s33
      %p47 = scmp.eq.s32.totalorder %s25, 3
      %p48 = por %p46, %p47
      %p50 = scmp.ne.s32.totalorder %s33, %s49
      %p51 = scmp.eq.s32.totalorder %s25, 0
      %p52 = por %p50, %p51
      %s53 = ssub.s32 %s19, %s26
      %p54 = scmp.eq.s32.totalorder %s53, 0
      %s56 = sadd.s32 %s55, 1
      %s57 = scalar_select %p54, %s55, %s56
      %p60 = pneg %p54
      %p61 = scmp.eq.s32.totalorder %s19, 3
      %p62 = por %p60, %p61
      %p63 = scmp.ne.s32.totalorder %s55, %s58
      %p64 = scmp.eq.s32.totalorder %s19, 0
      %p65 = por %p63, %p64
      %p66 = scmp.ne.s32.totalorder %s55, %s58
      %p67 = scmp.eq.s32.totalorder %s24, 3
      %p68 = por %p66, %p67
      %p69 = scmp.ne.s32.totalorder %s58, %s59
      %p70 = scmp.eq.s32.totalorder %s24, 0
      %p71 = por %p69, %p70
      %p72 = scmp.ne.s32.totalorder %s58, %s59
      %p73 = scmp.eq.s32.totalorder %s25, 3
      %p74 = por %p72, %p73
      %p76 = scmp.ne.s32.totalorder %s59, %s75
      %p77 = scmp.eq.s32.totalorder %s25, 0
      %p78 = por %p76, %p77
      %s80 = sadd.s32 %s79, 1
      %p83 = scmp.eq.s32.totalorder %s19, 3
      %p84 = scmp.ne.s32.totalorder %s79, %s81
      %p85 = scmp.eq.s32.totalorder %s19, 0
      %p86 = por %p84, %p85
      %p87 = scmp.ne.s32.totalorder %s79, %s81
      %p88 = scmp.eq.s32.totalorder %s24, 3
      %p89 = por %p87, %p88
      %p90 = scmp.ne.s32.totalorder %s81, %s82
      %p91 = scmp.eq.s32.totalorder %s24, 0
      %p92 = por %p90, %p91
      %p93 = scmp.ne.s32.totalorder %s81, %s82
      %p94 = scmp.eq.s32.totalorder %s25, 3
      %p95 = por %p93, %p94
      %p97 = scmp.ne.s32.totalorder %s82, %s96
      %p98 = scmp.eq.s32.totalorder %s25, 0
      %p99 = por %p97, %p98
      %s101 = sadd.s32 %s100, 1
      %p104 = scmp.eq.s32.totalorder %s19, 3
      %p105 = scmp.ne.s32.totalorder %s100, %s102
      %p106 = scmp.eq.s32.totalorder %s19, 0
      %p107 = por %p105, %p106
      %p108 = scmp.ne.s32.totalorder %s100, %s102
      %p109 = scmp.eq.s32.totalorder %s24, 3
      %p110 = por %p108, %p109
      %p111 = scmp.ne.s32.totalorder %s102, %s103
      %p112 = scmp.eq.s32.totalorder %s24, 0
      %p113 = por %p111, %p112
      %p114 = scmp.ne.s32.totalorder %s102, %s103
      %p115 = scmp.eq.s32.totalorder %s25, 3
      %p116 = por %p114, %p115
      %p118 = scmp.ne.s32.totalorder %s103, %s117
      %p119 = scmp.eq.s32.totalorder %s25, 0
      %p120 = por %p118, %p119
      %s121 = ssub.s32 %s19, %s26
      %p122 = scmp.eq.s32.totalorder %s121, 0
      %s124 = sadd.s32 %s123, 1
      %s125 = scalar_select %p122, %s123, %s124
      %p128 = pneg %p122
      %p129 = scmp.eq.s32.totalorder %s19, 3
      %p130 = por %p128, %p129
      %p131 = scmp.ne.s32.totalorder %s123, %s126
      %p132 = scmp.eq.s32.totalorder %s19, 0
      %p133 = por %p131, %p132
      %p134 = scmp.ne.s32.totalorder %s123, %s126
      %p135 = scmp.eq.s32.totalorder %s24, 3
      %p136 = por %p134, %p135
      %p137 = scmp.ne.s32.totalorder %s126, %s127
      %p138 = scmp.eq.s32.totalorder %s24, 0
      %p139 = por %p137, %p138
      %p140 = scmp.ne.s32.totalorder %s126, %s127
      %p141 = scmp.eq.s32.totalorder %s25, 3
      %p142 = por %p140, %p141
      %p144 = scmp.ne.s32.totalorder %s127, %s143
      %p145 = scmp.eq.s32.totalorder %s25, 0
      %p146 = por %p144, %p145
      %p147 = scmp.le.s32.totalorder 1, %s19
      %p148 = scmp.lt.s32.totalorder %s19, 5
      %p149 = pnand %p147, %p148
      %p150 = pneg %p149
      // Predicated region
      $region9: #{tpu_custom_call.1} parent=5 // pred_check
        _
      $region10: #{tpu_custom_call.1} parent=5 // pred_check_branch
        %152 = sbr.rel (%p149) target = $region12
      $region11: #{tpu_custom_call.1} parent=5 // pred_region
        %s153 = ssub.s32 %s19, 1
        // Predicated region
        $region13: #{tpu_custom_call.1} parent=11 // pred_check
          %p154 = pneg %p92
        $region14: #{tpu_custom_call.1} parent=11 // pred_check_branch
          %156 = sbr.rel (%p154) target = $region16
        $region15: #{tpu_custom_call.1} parent=11 // pred_region
          %s158 = ssub.s32 2048, 2048
          %159 = vsyncadd [#allocation6], %s158
          %s160 = sshll.u32 [#allocation7], 4
          %s161 = int_to_ptr.vmem [resolvable:$true] %s160
          %166 = dma.hbm_to_vmem [thread:$0]  %s2, 2048, %s161, [#allocation6], 128, 128, 8
        $region16: #{tpu_custom_call.1} parent=11 // pred_fallthru
          _
        // Predicated region
        $region17: #{tpu_custom_call.1} parent=11 // pred_check
          %p167 = pneg %p113
        $region18: #{tpu_custom_call.1} parent=11 // pred_check_branch
          %169 = sbr.rel (%p167) target = $region20
        $region19: #{tpu_custom_call.1} parent=11 // pred_region
          _
        $region20: #{tpu_custom_call.1} parent=11 // pred_fallthru
          _
      $region12: #{tpu_custom_call.1} parent=5 // pred_fallthru
        _
      %p170 = scmp.lt.s32.totalorder %s19, 4
      // Predicated region
      $region21: #{tpu_custom_call.1} parent=5 // pred_check
        %p171 = pneg %p170
      $region22: #{tpu_custom_call.1} parent=5 // pred_check_branch
        %173 = sbr.rel (%p171) target = $region24
      $region23: #{tpu_custom_call.1} parent=5 // pred_region
        // Predicated region
        $region25: #{tpu_custom_call.1} parent=23 // pred_check
          %p174 = pneg %p39
        $region26: #{tpu_custom_call.1} parent=23 // pred_check_branch
          %176 = sbr.rel (%p174) target = $region28
        $region27: #{tpu_custom_call.1} parent=23 // pred_region
          %s177 = sand.u32 %s29, 1
          %s178 = scalar_lea.sflag [#allocation3], %s177
          %s179 = sand.u32 %s29, 1
          %s180 = smul.addr %s179, 16
          %s181 = scalar_lea.vmem [#allocation2], %s180
          %s183 = ssub.s32 256, 256
          %184 = vsyncadd %s178, %s183
          %s185 = smul.addr %s19, 2
          %s186 = smul.addr %s185, 128
          %s187 = scalar_lea.hbm %s0, %s186
          %s188 = sshll.u32 %s181, 4
          %s189 = int_to_ptr.vmem [resolvable:$true] %s188
          %194 = dma.hbm_to_vmem [thread:$0]  %s187, 256, %s189, %s178, 128, 128, 8
        $region28: #{tpu_custom_call.1} parent=23 // pred_fallthru
          _
        // Predicated region
        $region29: #{tpu_custom_call.1} parent=23 // pred_check
          %p195 = pneg %p65
        $region30: #{tpu_custom_call.1} parent=23 // pred_check_branch
          %197 = sbr.rel (%p195) target = $region32
        $region31: #{tpu_custom_call.1} parent=23 // pred_region
          %s198 = sand.u32 %s19, 1
          %s199 = scalar_lea.sflag [#allocation6], %s198
          %s200 = sand.u32 %s55, 1
          %s201 = smul.addr %s200, 8
          %s202 = scalar_lea.vmem [#allocation5], %s201
          %s204 = ssub.s32 128, 128
          %205 = vsyncadd %s199, %s204
          %s206 = smul.addr %s19, 2
          %s207 = smul.addr %s206, 64
          %s208 = scalar_lea.hbm %s1, %s207
          %s209 = sshll.u32 %s202, 4
          %s210 = int_to_ptr.vmem [resolvable:$true] %s209
          %215 = dma.hbm_to_vmem [thread:$0]  %s208, 128, %s210, %s199, 64, 64, 4
        $region32: #{tpu_custom_call.1} parent=23 // pred_fallthru
          _
      $region24: #{tpu_custom_call.1} parent=5 // pred_fallthru
        _
      %p216 = scmp.le.s32.totalorder 1, %s19
      %p217 = scmp.lt.s32.totalorder %s19, 5
      %p218 = pnand %p216, %p217
      %p219 = pneg %p218
      // Predicated region
      $region33: #{tpu_custom_call.1} parent=5 // pred_check
        _
      $region34: #{tpu_custom_call.1} parent=5 // pred_check_branch
        %221 = sbr.rel (%p218) target = $region36
      $region35: #{tpu_custom_call.1} parent=5 // pred_region
        %s222 = ssub.s32 %s19, 1
        %s223 = sand.u32 %s32, 1
        %s224 = scalar_lea.sflag [#allocation3], %s223
        %s225 = sand.u32 %s32, 1
        %s226 = smul.addr %s225, 16
        %s227 = scalar_lea.vmem [#allocation2], %s226
        // Predicated region
        $region37: #{tpu_custom_call.1} parent=35 // pred_check
          %p228 = pneg %p45
        $region38: #{tpu_custom_call.1} parent=35 // pred_check_branch
          %230 = sbr.rel (%p228) target = $region40
        $region39: #{tpu_custom_call.1} parent=35 // pred_region
          %231 = dma.done %s224, 256
        $region40: #{tpu_custom_call.1} parent=35 // pred_fallthru
          _
        %s232 = sand.u32 %s24, 1
        %s233 = scalar_lea.sflag [#allocation6], %s232
        %s234 = sand.u32 %s58, 1
        %s235 = smul.addr %s234, 8
        %s236 = scalar_lea.vmem [#allocation5], %s235
        // Predicated region
        $region41: #{tpu_custom_call.1} parent=35 // pred_check
          %p237 = pneg %p71
        $region42: #{tpu_custom_call.1} parent=35 // pred_check_branch
          %239 = sbr.rel (%p237) target = $region44
        $region43: #{tpu_custom_call.1} parent=35 // pred_region
          %240 = dma.done %s233, 128
        $region44: #{tpu_custom_call.1} parent=35 // pred_fallthru
          _
        // Predicated region
        $region45: #{tpu_custom_call.1} parent=35 // pred_check
          %p241 = pneg %p92
        $region46: #{tpu_custom_call.1} parent=35 // pred_check_branch
          %243 = sbr.rel (%p241) target = $region48
        $region47: #{tpu_custom_call.1} parent=35 // pred_region
          %244 = dma.done [#allocation6], 2048
        $region48: #{tpu_custom_call.1} parent=35 // pred_fallthru
          _
        %s245 = sand.u32 %s32, 1
        %s246 = scalar_lea.sflag [#allocation3], %s245
        %s247 = sand.u32 %s32, 1
        %s248 = smul.addr %s247, 16
        %s249 = scalar_lea.vmem [#allocation2], %s248
        %p250 = pneg %p45
        %p251 = pneg %p42
        %s252 = sand.u32 %s24, 1
        %s253 = scalar_lea.sflag [#allocation6], %s252
        %s254 = sand.u32 %s58, 1
        %s255 = smul.addr %s254, 8
        %s256 = scalar_lea.vmem [#allocation5], %s255
        %p257 = pneg %p71
        %p258 = pneg %p68
        %p259 = pneg %p92
        %p260 = pneg %p89
        %p261 = pneg %p113
        %p262 = pneg %p110
        %p263 = pneg %p139
        %p264 = pneg %p136
        %s265 = sand.u32 %s126, 1
        %s266 = scalar_lea.sflag [#allocation4], %s265
        %s267 = sand.u32 %s126, 1
        %s268 = smul.addr %s267, 16
        %s269 = scalar_lea.vmem [#allocation8], %s268
        %v270 = vld [vmem:[%s227] sm:$0xff]
        %v271 = vld [vmem:[%s227 + $0x8] sm:$0xff]
        %v272 = vld [vmem:[#allocation7] sm:$0xff]
        %v273 = vld [vmem:[#allocation7 + $0x8] sm:$0xff]
        %v274 = vld [vmem:[#allocation7 + $0x10] sm:$0xff]
        %v275 = vld [vmem:[#allocation7 + $0x18] sm:$0xff]
        %v276 = vld [vmem:[#allocation7 + $0x20] sm:$0xff]
        %v277 = vld [vmem:[#allocation7 + $0x28] sm:$0xff]
        %v278 = vld [vmem:[#allocation7 + $0x30] sm:$0xff]
        %v279 = vld [vmem:[#allocation7 + $0x38] sm:$0xff]
        %v280 = vld [vmem:[#allocation7 + $0x40] sm:$0xff]
        %v281 = vld [vmem:[#allocation7 + $0x48] sm:$0xff]
        %v282 = vld [vmem:[#allocation7 + $0x50] sm:$0xff]
        %v283 = vld [vmem:[#allocation7 + $0x58] sm:$0xff]
        %v284 = vld [vmem:[#allocation7 + $0x60] sm:$0xff]
        %v285 = vld [vmem:[#allocation7 + $0x68] sm:$0xff]
        %v286 = vld [vmem:[#allocation7 + $0x70] sm:$0xff]
        %v287 = vld [vmem:[#allocation7 + $0x78] sm:$0xff]
        %288 = vmatprep.subr.mxu0 0.0
        %289 = vmatpush1.msra.mxu0 %v272
        %290 = vmatprep.subr.mxu0 0.0
        %291 = vmatpush1.msra.mxu0 %v273
        %292 = vmatprep.subr.mxu0 0.0
        %293 = vmatpush1.msra.mxu0 %v274
        %294 = vmatprep.subr.mxu0 0.0
        %295 = vmatpush1.msra.mxu0 %v275
        %296 = vmatprep.subr.mxu0 0.0
        %297 = vmatpush1.msra.mxu0 %v276
        %298 = vmatprep.subr.mxu0 0.0
        %299 = vmatpush1.msra.mxu0 %v277
        %300 = vmatprep.subr.mxu0 0.0
        %301 = vmatpush1.msra.mxu0 %v278
        %302 = vmatprep.subr.mxu0 0.0
        %303 = vmatpush1.msra.mxu0 %v279
        %304 = vmatprep.subr.mxu0 0.0
        %305 = vmatpush1.msra.mxu0 %v280
        %306 = vmatprep.subr.mxu0 0.0
        %307 = vmatpush1.msra.mxu0 %v281
        %308 = vmatprep.subr.mxu0 0.0
        %309 = vmatpush1.msra.mxu0 %v282
        %310 = vmatprep.subr.mxu0 0.0
        %311 = vmatpush1.msra.mxu0 %v283
        %312 = vmatprep.subr.mxu0 0.0
        %313 = vmatpush1.msra.mxu0 %v284
        %314 = vmatprep.subr.mxu0 0.0
        %315 = vmatpush1.msra.mxu0 %v285
        %316 = vmatprep.subr.mxu0 0.0
        %317 = vmatpush1.msra.mxu0 %v286
        %318 = vmatprep.subr.mxu0 0.0
        %319 = vmatpush1.msra.mxu0 %v287
        %320 = vmatprep.subr.mxu0 0.0
        %321 = vmatpush1.msra.mxu0 0.0
        %322 = vmatprep.subr.mxu0 0.0
        %323 = vmatpush1.msra.mxu0 0.0
        %324 = vmatprep.subr.mxu0 0.0
        %325 = vmatpush1.msra.mxu0 0.0
        %326 = vmatprep.subr.mxu0 0.0
        %327 = vmatpush1.msra.mxu0 0.0
        %328 = vmatprep.subr.mxu0 0.0
        %329 = vmatpush1.msra.mxu0 0.0
        %330 = vmatprep.subr.mxu0 0.0
        %331 = vmatpush1.msra.mxu0 0.0
        %332 = vmatprep.subr.mxu0 0.0
        %333 = vmatpush1.msra.mxu0 0.0
        %334 = vmatprep.subr.mxu0 0.0
        %335 = vmatpush1.msra.mxu0 0.0
        %336 = vmatprep.subr.mxu0 0.0
        %337 = vmatpush1.msra.mxu0 0.0
        %338 = vmatprep.subr.mxu0 0.0
        %339 = vmatpush1.msra.mxu0 0.0
        %340 = vmatprep.subr.mxu0 0.0
        %341 = vmatpush1.msra.mxu0 0.0
        %342 = vmatprep.subr.mxu0 0.0
        %343 = vmatpush1.msra.mxu0 0.0
        %344 = vmatprep.subr.mxu0 0.0
        %345 = vmatpush1.msra.mxu0 0.0
        %346 = vmatprep.subr.mxu0 0.0
        %347 = vmatpush1.msra.mxu0 0.0
        %348 = vmatprep.subr.mxu0 0.0
        %349 = vmatpush1.msra.mxu0 0.0
        %350 = vmatprep.subr.mxu0 0.0
        %351 = vmatpush1.msra.mxu0 0.0
        %352 = vmatprep.mubr.f32.mxu0 0.0
        %353 = vmatmul.mubr.f32.gmra.mrb[0].mxu0 %v270
        %v354 = vpop.f32.mrb[0].mxu0
        %v355 = vadd.f32 0.0, %v354
        %v356 = vpop.f32.mrb[0].mxu0
        %357 = vmatprep.mubr.f32.mxu0 0.0
        %358 = vmatmul.mubr.f32.gmra.mrb[0].mxu0 %v271
        %v359 = vpop.f32.mrb[0].mxu0
        %v360 = vadd.f32 0.0, %v359
        %v361 = vpop.f32.mrb[0].mxu0
        %362 = vdwg.mxu0
        %v363 = vld [vmem:[%s236] sm:$0xf]
        %v364 = vld [vmem:[%s236 + $0x4] sm:$0xf]
        %v365 = vunpack.c.l.bf16 %v363
        %v366 = vunpack.c.l.bf16 %v364
        %v367 = vld [vmem:[%s3] sm:$0x1]
        %v369 = vlaneseq
        %v370 = vshrl.u32 %v369, 7
        %v371 = vsub.s32 0, %v370
        %v372 = vrot.slane %v367, %v371
        %vm374 = vcmask 130048
        %v376 = vsel %vm374, %v365, 0
        %v379 = vsel %vm374, %v366, 0
        %381 = vmatprep.subr.mxu0 0.0
        %382 = vmatpush1.msra.mxu0 %v355
        %383 = vmatprep.subr.mxu0 0.0
        %384 = vmatpush1.msra.mxu0 %v360
        %385 = vmatprep.subr.mxu0 0.0
        %386 = vmatpush1.msra.mxu0 0.0
        %387 = vmatprep.subr.mxu0 0.0
        %388 = vmatpush1.msra.mxu0 0.0
        %389 = vmatprep.subr.mxu0 0.0
        %390 = vmatpush1.msra.mxu0 0.0
        %391 = vmatprep.subr.mxu0 0.0
        %392 = vmatpush1.msra.mxu0 0.0
        %393 = vmatprep.subr.mxu0 0.0
        %394 = vmatpush1.msra.mxu0 0.0
        %395 = vmatprep.subr.mxu0 0.0
        %396 = vmatpush1.msra.mxu0 0.0
        %397 = vmatprep.subr.mxu0 0.0
        %398 = vmatpush1.msra.mxu0 0.0
        %399 = vmatprep.subr.mxu0 0.0
        %400 = vmatpush1.msra.mxu0 0.0
        %401 = vmatprep.subr.mxu0 0.0
        %402 = vmatpush1.msra.mxu0 0.0
        %403 = vmatprep.subr.mxu0 0.0
        %404 = vmatpush1.msra.mxu0 0.0
        %405 = vmatprep.subr.mxu0 0.0
        %406 = vmatpush1.msra.mxu0 0.0
        %407 = vmatprep.subr.mxu0 0.0
        %408 = vmatpush1.msra.mxu0 0.0
        %409 = vmatprep.subr.mxu0 0.0
        %410 = vmatpush1.msra.mxu0 0.0
        %411 = vmatprep.subr.mxu0 0.0
        %412 = vmatpush1.msra.mxu0 0.0
        %413 = vmatprep.subr.mxu0 0.0
        %414 = vmatpush1.msra.mxu0 0.0
        %415 = vmatprep.subr.mxu0 0.0
        %416 = vmatpush1.msra.mxu0 0.0
        %417 = vmatprep.subr.mxu0 0.0
        %418 = vmatpush1.msra.mxu0 0.0
        %419 = vmatprep.subr.mxu0 0.0
        %420 = vmatpush1.msra.mxu0 0.0
        %421 = vmatprep.subr.mxu0 0.0
        %422 = vmatpush1.msra.mxu0 0.0
        %423 = vmatprep.subr.mxu0 0.0
        %424 = vmatpush1.msra.mxu0 0.0
        %425 = vmatprep.subr.mxu0 0.0
        %426 = vmatpush1.msra.mxu0 0.0
        %427 = vmatprep.subr.mxu0 0.0
        %428 = vmatpush1.msra.mxu0 0.0
        %429 = vmatprep.subr.mxu0 0.0
        %430 = vmatpush1.msra.mxu0 0.0
        %431 = vmatprep.subr.mxu0 0.0
        %432 = vmatpush1.msra.mxu0 0.0
        %433 = vmatprep.subr.mxu0 0.0
        %434 = vmatpush1.msra.mxu0 0.0
        %435 = vmatprep.subr.mxu0 0.0
        %436 = vmatpush1.msra.mxu0 0.0
        %437 = vmatprep.subr.mxu0 0.0
        %438 = vmatpush1.msra.mxu0 0.0
        %439 = vmatprep.subr.mxu0 0.0
        %440 = vmatpush1.msra.mxu0 0.0
        %441 = vmatprep.subr.mxu0 0.0
        %442 = vmatpush1.msra.mxu0 0.0
        %443 = vmatprep.subr.mxu0 0.0
        %444 = vmatpush1.msra.mxu0 0.0
        %445 = vmatprep.mubr.f32.mxu0 0.0
        %446 = vmatmul.mubr.f32.gmra.mrb[0].mxu0 %v376
        %v447 = vpop.f32.mrb[0].mxu0
        %v448 = vadd.f32 %v372, %v447
        %v449 = vpop.f32.mrb[0].mxu0
        %450 = vmatprep.mubr.f32.mxu0 0.0
        %451 = vmatmul.mubr.f32.gmra.mrb[0].mxu0 %v379
        %v452 = vpop.f32.mrb[0].mxu0
        %v453 = vadd.f32 %v372, %v452
        %v454 = vpop.f32.mrb[0].mxu0
        %455 = vdwg.mxu0
        %456 = vst [vmem:[%s269] sm:$0xff] %v448
        %457 = vst [vmem:[%s269 + $0x8] sm:$0xff] %v453
        %s458 = sand.u32 %s126, 1
        %s459 = scalar_lea.sflag [#allocation4], %s458
        %s460 = sand.u32 %s126, 1
        %s461 = smul.addr %s460, 16
        %s462 = scalar_lea.vmem [#allocation8], %s461
        // Predicated region
        $region49: #{tpu_custom_call.1} parent=35 // pred_check
          %p463 = pneg %p136
        $region50: #{tpu_custom_call.1} parent=35 // pred_check_branch
          %465 = sbr.rel (%p463) target = $region52
        $region51: #{tpu_custom_call.1} parent=35 // pred_region
          %s467 = ssub.s32 256, 256
          %468 = vsyncadd %s459, %s467
          %s469 = smul.addr %s24, 2
          %s470 = smul.addr %s469, 128
          %s471 = scalar_lea.hbm %s4, %s470
          %s472 = sshll.u32 %s462, 4
          %s473 = int_to_ptr.vmem [resolvable:$true] %s472
          %478 = dma.vmem_to_hbm [thread:$0]  %s473, 256, %s471, %s459, 128, 128, 8
        $region52: #{tpu_custom_call.1} parent=35 // pred_fallthru
          _
      $region36: #{tpu_custom_call.1} parent=5 // pred_fallthru
        _
      %p479 = scmp.le.s32.totalorder 2, %s19
      // Predicated region
      $region53: #{tpu_custom_call.1} parent=5 // pred_check
        %p480 = pneg %p479
      $region54: #{tpu_custom_call.1} parent=5 // pred_check_branch
        %482 = sbr.rel (%p480) target = $region56
      $region55: #{tpu_custom_call.1} parent=5 // pred_region
        %s483 = ssub.s32 %s19, 2
        // Predicated region
        $region57: #{tpu_custom_call.1} parent=55 // pred_check
          %p484 = pneg %p142
        $region58: #{tpu_custom_call.1} parent=55 // pred_check_branch
          %486 = sbr.rel (%p484) target = $region60
        $region59: #{tpu_custom_call.1} parent=55 // pred_region
          %s487 = sand.u32 %s127, 1
          %s488 = scalar_lea.sflag [#allocation4], %s487
          %s489 = sand.u32 %s127, 1
          %s490 = smul.addr %s489, 16
          %s491 = scalar_lea.vmem [#allocation8], %s490
          %492 = dma.done %s488, 256
        $region60: #{tpu_custom_call.1} parent=55 // pred_fallthru
          _
      $region56: #{tpu_custom_call.1} parent=5 // pred_fallthru
        _
    $region6: #{tpu_custom_call.1} parent=1 // loop_footer
      %s23 = sadd.s32 1, %s19
    $region7: #{tpu_custom_call.1} parent=1 // loop_footer_branch
      %18 = sbr.rel target = $region3
    $region8: #{tpu_custom_call.1} parent=1 // loop_exit
      _
    %493 = vsyncpa [#allocation3], 1
    %s494 = scalar_lea.sflag [#allocation3], 1
    %495 = vsyncpa %s494, 1
    %496 = vsyncpa [#allocation6], 1
    %s497 = scalar_lea.sflag [#allocation6], 1
    %498 = vsyncpa %s497, 1
    %499 = vsyncpa [#allocation4], 1
    %s500 = scalar_lea.sflag [#allocation4], 1
    %501 = vsyncpa %s500, 1

</llo_original>
